<compile_context>
chip_gen: v6e
topology: v6e:2x2x1
jax: 0.10.0
libtpu: 0.0.40
codegen_flags: <defaults>
</compile_context>

<pallas_src>
import functools

import jax
import jax.numpy as jnp
from jax.experimental import pallas as pl
from jax.experimental.pallas import tpu as pltpu


# --------------------------------------------------------------------------- kernels


def _fused_kernel(p_ref, w_ref, o_ref, acc_ref):
    """Single-pass path: full HW row is VMEM-resident.

    p_ref:   (tk, HW)  bf16 im2col patches for one image (batch dim squeezed)
    w_ref:   (tc, tk)  bf16 flattened conv weights
    o_ref:   (tc, HW)  bf16 normalized + activated output
    acc_ref: (tc, HW)  f32 conv accumulator (scratch, persists across K steps)
    """
    k = pl.program_id(2)
    part = jnp.dot(w_ref[...], p_ref[...], preferred_element_type=jnp.float32)

    @pl.when(k == 0)
    def _init():
        acc_ref[...] = part

    @pl.when(k != 0)
    def _accum():
        acc_ref[...] += part

    @pl.when(k == pl.num_programs(2) - 1)
    def _finalize():
        y = acc_ref[...]
        inv_hw = 1.0 / y.shape[1]
        # Exact two-pass InstanceNorm stats (affine=False, biased var, eps=1e-5).
        mean = jnp.sum(y, axis=1, keepdims=True) * inv_hw
        cen = y - mean
        var = jnp.sum(cen * cen, axis=1, keepdims=True) * inv_hw
        y_n = cen * jax.lax.rsqrt(var + 1e-5)
        o_ref[...] = jnp.where(y_n >= 0.0, y_n, 0.2 * y_n).astype(o_ref.dtype)


def _conv_stats_kernel(p_ref, w_ref, y_ref, s_ref):
    """Two-phase path, phase 1: conv tile + per-HW-tile partial IN stats.

    p_ref: (tk, thw) bf16 patches; w_ref: (tc, tk) bf16 weights
    y_ref: (tc, thw) f32 conv output tile (also serves as the K accumulator)
    s_ref: (tc, 2)   f32 partial [sum, sum-of-squares] for this HW tile
    Padded HW columns hold exact zeros (no bias is added), so they contribute nothing
    to the partial sums; padded Cout rows give all-zero stats and zero outputs, and
    are sliced off by the wrapper.
    """
    k = pl.program_id(3)
    part = jnp.dot(w_ref[...], p_ref[...], preferred_element_type=jnp.float32)

    @pl.when(k == 0)
    def _init():
        y_ref[...] = part

    @pl.when(k != 0)
    def _accum():
        y_ref[...] += part

    @pl.when(k == pl.num_programs(3) - 1)
    def _finalize():
        y = y_ref[...]
        s = jnp.sum(y, axis=1, keepdims=True)
        s2 = jnp.sum(y * y, axis=1, keepdims=True)
        s_ref[...] = jnp.concatenate([s, s2], axis=1)


def _norm_act_kernel(y_ref, mu_ref, rs_ref, o_ref):
    """Two-phase path, phase 2: lane-dense normalize + LeakyReLU(0.2) sweep."""
    y_n = (y_ref[...] - mu_ref[...]) * rs_ref[...]
    o_ref[...] = jnp.where(y_n >= 0.0, y_n, 0.2 * y_n).astype(o_ref.dtype)


# ----------------------------------------------------------------------- tile sizing


def _round_up(v, m):
    return ((v + m - 1) // m) * m


def _block_bytes(tc, tk, thw):
    # bf16 patch block + bf16 weight block, both double-buffered, plus the f32
    # (tc, thw) accumulator/output footprint (scratch + bf16-out in the fused path,
    # double-buffered f32 output block in the tiled path -- same byte count).
    return 4 * tk * thw + 4 * tc * tk + 8 * tc * thw


def _vmem_capacity_bytes():
    try:
        cap = int(pltpu.get_tpu_info().vmem_capacity_bytes)
        if cap >= (16 << 20):
            return cap
    except Exception:
        pass
    return 64 << 20  # conservative default = v7x per-core VMEM


def _vmem_limit_bytes(block_bytes, cap):
    # >= real footprint + Mosaic internal-scratch headroom, <= physical capacity.
    need = block_bytes + block_bytes // 4 + (8 << 20)
    return int(min(cap, max(need, 32 << 20)))


def _choose_tiles(cout, kk, hw, cap, force_hw_tile=None):
    """VMEM-budget-driven (tc, cout_p, tk, kp, thw, hwp) selection."""
    budget = (cap * 3) // 5  # ~60% of capacity for the pipelined blocks
    # Wider Cout tiles on 128 MiB parts (v5e/v6e) avoid re-reading the patch stream
    # once per Cout tile; keep 256 on v7x (64 MiB).
    tc_cap = 512 if cap >= (96 << 20) else 256
    tc = min(_round_up(cout, 8), tc_cap)
    cout_p = _round_up(cout, tc)

    # K-tile candidates, largest first (fewer read-modify-write passes over the
    # accumulator and less per-step overhead).
    k_cands = [kk]
    t = _round_up(kk, 256) // 2
    while t >= 256:
        if t < kk:
            k_cands.append(t)
        t //= 2

    # HW-tile candidates: full HW first (enables the fully fused single pass), then
    # lane-dense multiples of 128.
    if force_hw_tile is not None and force_hw_tile < hw:
        hw_cands = [force_hw_tile]
    else:
        hw_cands = [hw]
        t = 2048
        while t >= 128:
            if t < hw:
                hw_cands.append(t)
            t //= 2

    for thw in hw_cands:
        for tk in k_cands:
            if _block_bytes(tc, tk, thw) <= budget:
                kp = kk if tk == kk else _round_up(kk, tk)
                hwp = hw if thw == hw else _round_up(hw, thw)
                return tc, cout_p, tk, kp, thw, hwp

    # Last resort: smallest lane-dense tiles.
    tk = min(kk, 256)
    thw = min(hw, 128)
    return (tc, cout_p, tk, kk if tk == kk else _round_up(kk, tk),
            thw, hw if thw == hw else _round_up(hw, thw))


def _im2col_khw(x, k, s, p):
    """x: (N, Cin, H, W) -> patches (N, Cin*k*k, Ho*Wo), K ordered (cin, kh, kw)."""
    n, cin, h, w = x.shape
    ho = (h + 2 * p - k) // s + 1
    wo = (w + 2 * p - k) // s + 1
    xp = jnp.pad(x, ((0, 0), (0, 0), (p, p), (p, p)))
    cols = []
    for kh in range(k):
        for kw in range(k):
            cols.append(xp[:, :, kh:kh + s * ho:s, kw:kw + s * wo:s])
    patches = jnp.stack(cols, axis=2).reshape(n, cin * k * k, ho * wo)
    return patches, ho, wo


# -------------------------------------------------------------------------- wrapper


@functools.partial(
    jax.jit,
    static_argnames=("kernel_size", "stride", "padding", "out_dtype", "force_hw_tile"))
def conv_down_block(x, weight, bias=None, *, kernel_size=4, stride=2, padding=1,
                    out_dtype=jnp.bfloat16, force_hw_tile=None):
    """x: (N, Cin, H, W); weight: (Cout, Cin, k, k); bias: (Cout,) (cancels, see below).

    Returns (N, Cout, Ho, Wo) in `out_dtype` (bf16 by default; pass jnp.float32 for
    strict dtype parity with PyTorch).  `force_hw_tile` (a multiple of 128) is a test
    knob forcing the two-phase HW-tiled path.
    """
    n, cin, _, _ = x.shape
    cout = weight.shape[0]
    k = kernel_size

    cap = _vmem_capacity_bytes()

    # bf16 BEFORE im2col: halves the HBM bytes of the materialized patch pass.
    # TODO(synk): build the im2col inside the kernel via strided async copies of the
    # padded input rows to remove the k^2/s^2-duplicated HBM intermediate entirely.
    patches, ho, wo = _im2col_khw(x.astype(jnp.bfloat16), k, stride, padding)
    hw = ho * wo
    kk = cin * k * k

    tc, cout_p, tk, kp, thw, hwp = _choose_tiles(cout, kk, hw, cap, force_hw_tile)
    fused = thw == hw

    if kp > kk or hwp > hw:
        patches = jnp.pad(patches, ((0, 0), (0, kp - kk), (0, hwp - hw)))
    w_flat = weight.reshape(cout, kk).astype(jnp.bfloat16)
    if kp > kk or cout_p > cout:
        w_flat = jnp.pad(w_flat, ((0, cout_p - cout), (0, kp - kk)))

    # The conv bias is a per-channel constant shift, which cancels exactly under
    # InstanceNorm2d(affine=False); dropping it also removes the large-mean
    # cancellation risk in the one-pass variance.
    del bias

    n_ct = cout_p // tc
    n_kt = kp // tk
    n_ht = hwp // thw

    if fused:
        out = pl.pallas_call(
            _fused_kernel,
            out_shape=jax.ShapeDtypeStruct((n, cout_p, hw), out_dtype),
            grid_spec=pltpu.PrefetchScalarGridSpec(
                num_scalar_prefetch=0,
                grid=(n, n_ct, n_kt),
                in_specs=[
                    pl.BlockSpec((None, tk, hw), lambda ni, ci, ki: (ni, ki, 0)),
                    pl.BlockSpec((tc, tk), lambda ni, ci, ki: (ci, ki)),
                ],
                out_specs=pl.BlockSpec((None, tc, hw), lambda ni, ci, ki: (ni, ci, 0)),
                scratch_shapes=[pltpu.VMEM((tc, hw), jnp.float32)],
            ),
            compiler_params=pltpu.CompilerParams(
                dimension_semantics=("parallel", "parallel", "arbitrary"),
                vmem_limit_bytes=_vmem_limit_bytes(_block_bytes(tc, tk, hw), cap),
            ),
        )(patches, w_flat)
        return out[:, :cout, :].reshape(n, cout, ho, wo)

    # ---- two-phase path: HW tiled; InstanceNorm stats via per-tile partials ----
    conv_out, stats = pl.pallas_call(
        _conv_stats_kernel,
        out_shape=(
            jax.ShapeDtypeStruct((n, cout_p, hwp), jnp.float32),
            jax.ShapeDtypeStruct((n, n_ht, cout_p, 2), jnp.float32),
        ),
        grid_spec=pltpu.PrefetchScalarGridSpec(
            num_scalar_prefetch=0,
            grid=(n, n_ct, n_ht, n_kt),
            in_specs=[
                pl.BlockSpec((None, tk, thw), lambda ni, ci, hi, ki: (ni, ki, hi)),
                pl.BlockSpec((tc, tk), lambda ni, ci, hi, ki: (ci, ki)),
            ],
            out_specs=[
                pl.BlockSpec((None, tc, thw), lambda ni, ci, hi, ki: (ni, ci, hi)),
                pl.BlockSpec((None, None, tc, 2),
                             lambda ni, ci, hi, ki: (ni, hi, ci, 0)),
            ],
        ),
        compiler_params=pltpu.CompilerParams(
            dimension_semantics=("parallel", "parallel", "parallel", "arbitrary"),
            vmem_limit_bytes=_vmem_limit_bytes(_block_bytes(tc, tk, thw), cap),
        ),
    )(patches, w_flat)

    # Tiny XLA combine of the per-HW-tile partials.  Padded HW columns are exact
    # zeros, so dividing by the real HW count yields the exact biased statistics.
    tot = jnp.sum(stats, axis=1)                # (N, Cout_p, 2)
    mean = tot[..., 0:1] / float(hw)            # (N, Cout_p, 1)
    ex2 = tot[..., 1:2] / float(hw)
    var = jnp.maximum(ex2 - mean * mean, 0.0)
    rstd = jax.lax.rsqrt(var + 1e-5)

    out = pl.pallas_call(
        _norm_act_kernel,
        out_shape=jax.ShapeDtypeStruct((n, cout_p, hwp), out_dtype),
        grid_spec=pltpu.PrefetchScalarGridSpec(
            num_scalar_prefetch=0,
            grid=(n, n_ct, n_ht),
            in_specs=[
                pl.BlockSpec((None, tc, thw), lambda ni, ci, hi: (ni, ci, hi)),
                pl.BlockSpec((None, tc, 1), lambda ni, ci, hi: (ni, ci, 0)),
                pl.BlockSpec((None, tc, 1), lambda ni, ci, hi: (ni, ci, 0)),
            ],
            out_specs=pl.BlockSpec((None, tc, thw), lambda ni, ci, hi: (ni, ci, hi)),
        ),
        compiler_params=pltpu.CompilerParams(
            dimension_semantics=("parallel", "parallel", "parallel"),
            vmem_limit_bytes=_vmem_limit_bytes(12 * tc * thw, cap),
        ),
    )(conv_out, mean, rstd)

    # TODO(synk): for late layers with HW < 128, fold N (or several HW tiles) into the
    # lane axis with a segmented IN reduction to keep output stores lane-dense.
    return out[:, :cout, :hw].reshape(n, cout, ho, wo)


# ----------------------------------------------------------------------------- test


if __name__ == "__main__":
    key = jax.random.PRNGKey(0)

    def reference(x, weight, bias, stride=2, padding=1):
        xb = x.astype(jnp.bfloat16).astype(jnp.float32)
        wb = weight.astype(jnp.bfloat16).astype(jnp.float32)
        y = jax.lax.conv_general_dilated(
            xb, wb, window_strides=(stride, stride),
            padding=((padding, padding), (padding, padding)),
            dimension_numbers=("NCHW", "OIHW", "NCHW"),
            precision=jax.lax.Precision.HIGHEST,
        ) + bias.reshape(1, -1, 1, 1)
        mean = jnp.mean(y, axis=(2, 3), keepdims=True)
        var = jnp.mean((y - mean) ** 2, axis=(2, 3), keepdims=True)
        yn = (y - mean) * jax.lax.rsqrt(var + 1e-5)
        return jnp.where(yn >= 0.0, yn, 0.2 * yn)

    def run_case(idx, n, cin, cout, hwi, force_hw_tile=None):
        ks = jax.random.split(jax.random.fold_in(key, idx), 3)
        x = jax.random.normal(ks[0], (n, cin, hwi, hwi), dtype=jnp.float32)
        bound = 1.0 / float(cin * 16) ** 0.5
        weight = jax.random.uniform(ks[1], (cout, cin, 4, 4), jnp.float32, -bound, bound)
        bias = jax.random.uniform(ks[2], (cout,), jnp.float32, -bound, bound)
        y = conv_down_block(x, weight, bias, kernel_size=4, stride=2, padding=1,
                            force_hw_tile=force_hw_tile)
        y = jax.block_until_ready(y)
        y_ref = reference(x, weight, bias)
        assert y.shape == y_ref.shape, (y.shape, y_ref.shape)
        err = float(jnp.max(jnp.abs(y.astype(jnp.float32) - y_ref)))
        assert err < 5e-2, f"case {idx}: max abs err {err}"

    # 1) module-spec shape: fully fused single-pass path (full HW resident in VMEM).
    run_case(1, 2, 4, 8, 16)
    # 2) two-phase HW-tiled path (forced 128-lane HW tiles), HW splits evenly.
    run_case(2, 2, 8, 16, 32, force_hw_tile=128)
    # 3) two-phase HW-tiled path with a ragged (zero-padded) last HW tile.
    run_case(3, 1, 4, 8, 40, force_hw_tile=128)

    print("KERNEL_OK")
</pallas_src>

<mosaic_0001>
module attributes {stable_mosaic.version = 11 : i64} {
  func.func @_fused_kernel(%arg0: i32, %arg1: i32, %arg2: i32, %arg3: memref<1x64x64xbf16, #tpu.memory_space<vmem>>, %arg4: memref<8x64xbf16, #tpu.memory_space<vmem>>, %arg5: memref<1x8x64xbf16, #tpu.memory_space<vmem>>, %arg6: memref<8x64xf32, #tpu.memory_space<vmem>>) attributes {dimension_semantics = [#tpu.dimension_semantics<parallel>, #tpu.dimension_semantics<parallel>, #tpu.dimension_semantics<arbitrary>], iteration_bounds = array<i64: 2, 1, 1>, scalar_prefetch = 0 : i64, scratch_operands = 1 : i64, tpu.core_type = #tpu.core_type<tc>, window_params = [{transform_indices = @transform_0, window_bounds = array<i64: 1, 64, 64>}, {transform_indices = @transform_1, window_bounds = array<i64: 8, 64>}, {transform_indices = @transform_2, window_bounds = array<i64: 1, 8, 64>}]} {
    %c0 = arith.constant 0 : index
    %c0_0 = arith.constant 0 : index
    %0 = vector.load %arg4[%c0, %c0_0] : memref<8x64xbf16, #tpu.memory_space<vmem>>, vector<8x64xbf16>
    %c0_1 = arith.constant 0 : index
    %c0_2 = arith.constant 0 : index
    %c0_3 = arith.constant 0 : index
    %1 = vector.load %arg3[%c0_1, %c0_2, %c0_3] : memref<1x64x64xbf16, #tpu.memory_space<vmem>>, vector<1x64x64xbf16>
    %2 = vector.shape_cast %1 : vector<1x64x64xbf16> to vector<64x64xbf16>
    %cst = arith.constant dense<0.000000e+00> : vector<8x64xf32>
    %3 = tpu.matmul %0, %2, %cst {dimension_numbers = #tpu.dot_dimension_numbers<[1], [0], [0], [1], [0, 0, 1, 1], [], []>} : vector<8x64xbf16>, vector<64x64xbf16>, vector<8x64xf32> -> vector<8x64xf32>
    %c0_i32 = arith.constant 0 : i32
    %4 = arith.cmpi eq, %arg2, %c0_i32 : i32
    %5 = arith.extui %4 : i1 to i32
    %c0_i32_4 = arith.constant 0 : i32
    %6 = arith.cmpi ne, %5, %c0_i32_4 : i32
    scf.if %6 {
      %c0_9 = arith.constant 0 : index
      %c0_10 = arith.constant 0 : index
      %13 = vector.load %arg6[%c0_9, %c0_10] : memref<8x64xf32, #tpu.memory_space<vmem>>, vector<8x64xf32>
      tpu.vector_store %arg6[%c0_9, %c0_10], %3 {strides = array<i32>} : memref<8x64xf32, #tpu.memory_space<vmem>>, vector<8x64xf32>,
    } else {
    }
    %c0_i32_5 = arith.constant 0 : i32
    %7 = arith.cmpi ne, %arg2, %c0_i32_5 : i32
    %8 = arith.extui %7 : i1 to i32
    %c0_i32_6 = arith.constant 0 : i32
    %9 = arith.cmpi ne, %8, %c0_i32_6 : i32
    scf.if %9 {
      %c0_9 = arith.constant 0 : index
      %c0_10 = arith.constant 0 : index
      %13 = vector.load %arg6[%c0_9, %c0_10] : memref<8x64xf32, #tpu.memory_space<vmem>>, vector<8x64xf32>
      %14 = arith.addf %13, %3 : vector<8x64xf32>
      %c0_11 = arith.constant 0 : index
      %c0_12 = arith.constant 0 : index
      %15 = vector.load %arg6[%c0_11, %c0_12] : memref<8x64xf32, #tpu.memory_space<vmem>>, vector<8x64xf32>
      tpu.vector_store %arg6[%c0_11, %c0_12], %14 {strides = array<i32>} : memref<8x64xf32, #tpu.memory_space<vmem>>, vector<8x64xf32>,
    } else {
    }
    %c0_i32_7 = arith.constant 0 : i32
    %10 = arith.cmpi eq, %arg2, %c0_i32_7 : i32
    %11 = arith.extui %10 : i1 to i32
    %c0_i32_8 = arith.constant 0 : i32
    %12 = arith.cmpi ne, %11, %c0_i32_8 : i32
    scf.if %12 {
      %c0_9 = arith.constant 0 : index
      %c0_10 = arith.constant 0 : index
      %13 = vector.load %arg6[%c0_9, %c0_10] : memref<8x64xf32, #tpu.memory_space<vmem>>, vector<8x64xf32>
      %cst_11 = arith.constant dense<0.000000e+00> : vector<8xf32>
      %14 = vector.multi_reduction <add>, %13, %cst_11 [1] : vector<8x64xf32> to vector<8xf32>
      %15 = vector.shape_cast %14 : vector<8xf32> to vector<8x1xf32>
      %cst_12 = arith.constant 1.562500e-02 : f32
      %16 = vector.broadcast %cst_12 : f32 to vector<8x1xf32>
      %17 = arith.mulf %15, %16 : vector<8x1xf32>
      %18 = vector.broadcast %17 : vector<8x1xf32> to vector<8x64xf32>
      %19 = arith.subf %13, %18 : vector<8x64xf32>
      %20 = arith.mulf %19, %19 : vector<8x64xf32>
      %cst_13 = arith.constant dense<0.000000e+00> : vector<8xf32>
      %21 = vector.multi_reduction <add>, %20, %cst_13 [1] : vector<8x64xf32> to vector<8xf32>
      %22 = vector.shape_cast %21 : vector<8xf32> to vector<8x1xf32>
      %cst_14 = arith.constant 1.562500e-02 : f32
      %23 = vector.broadcast %cst_14 : f32 to vector<8x1xf32>
      %24 = arith.mulf %22, %23 : vector<8x1xf32>
      %cst_15 = arith.constant 9.99999974E-6 : f32
      %25 = vector.broadcast %cst_15 : f32 to vector<8x1xf32>
      %26 = arith.addf %24, %25 : vector<8x1xf32>
      %27 = math.rsqrt %26 : vector<8x1xf32>
      %28 = vector.broadcast %27 : vector<8x1xf32> to vector<8x64xf32>
      %29 = arith.mulf %19, %28 : vector<8x64xf32>
      %cst_16 = arith.constant 0.000000e+00 : f32
      %30 = vector.broadcast %cst_16 : f32 to vector<8x64xf32>
      %31 = arith.cmpf oge, %29, %30 : vector<8x64xf32>
      %cst_17 = arith.constant 2.000000e-01 : f32
      %32 = vector.broadcast %cst_17 : f32 to vector<8x64xf32>
      %33 = arith.mulf %32, %29 : vector<8x64xf32>
      %34 = arith.select %31, %29, %33 : vector<8x64xi1>, vector<8x64xf32>
      %35 = arith.truncf %34 : vector<8x64xf32> to vector<8x64xbf16>
      %c0_18 = arith.constant 0 : index
      %c0_19 = arith.constant 0 : index
      %c0_20 = arith.constant 0 : index
      %36 = vector.load %arg5[%c0_18, %c0_19, %c0_20] : memref<1x8x64xbf16, #tpu.memory_space<vmem>>, vector<1x8x64xbf16>
      %37 = vector.shape_cast %36 : vector<1x8x64xbf16> to vector<8x64xbf16>
      %38 = vector.shape_cast %35 : vector<8x64xbf16> to vector<1x8x64xbf16>
      tpu.vector_store %arg5[%c0_18, %c0_19, %c0_20], %38 {strides = array<i32>} : memref<1x8x64xbf16, #tpu.memory_space<vmem>>, vector<1x8x64xbf16>,
    } else {
    }
    return
  }
  func.func @transform_0(%arg0: i32, %arg1: i32, %arg2: i32) -> (i32, i32, i32) {
    %c0_i32 = arith.constant 0 : i32
    %c0_i32_0 = arith.constant 0 : i32
    return %arg0, %arg2, %c0_i32 : i32, i32, i32
  }
  func.func @transform_1(%arg0: i32, %arg1: i32, %arg2: i32) -> (i32, i32) {
    %c0_i32 = arith.constant 0 : i32
    return %arg1, %arg2 : i32, i32
  }
  func.func @transform_2(%arg0: i32, %arg1: i32, %arg2: i32) -> (i32, i32, i32) {
    %c0_i32 = arith.constant 0 : i32
    %c0_i32_0 = arith.constant 0 : i32
    return %arg0, %arg1, %c0_i32 : i32, i32, i32
  }
}

</mosaic_0001>

<llo_original>
// kernel: conv_down_block.1
$region0: #{conv_down_block.1}
  #allocation0 [shape = 'u32[]', space=smem, size = 0x4, offset = 0x4, fixed_abs, tag = 'smem constant byte address 0x4 - core index']
  #allocation1 [shape = 'u32[144,128]{1,0:T(1,128)}', space=vmem, size = 0x12000, scoped, tag = 'internal scratch']
  #allocation2 [shape = 'f32[8,64]{1,0:T(8,128)}', space=vmem, size = 0x1000, scoped, tag = 'scratch operand']
  %s0 = inlined_call_operand.vmem [shape: bf16[2,64,64], index: 0, kind: input, shape index: {}]
  %s1 = inlined_call_operand.vmem [shape: bf16[8,64], index: 1, kind: input, shape index: {}]
  %s2 = inlined_call_operand.vmem [shape: bf16[2,8,64], index: 2, kind: output, shape index: {}]
  %s3 = sld [smem:[#allocation0]]
  $region53: #{conv_down_block.1} parent=0
    _
  %s5 = ssub.s32 1, %s3
  %s6 = scalar_select 0, %s5, %s3
  loop: start=0, step=1, limit=4
  $region2: #{conv_down_block.1} parent=0 // loop_pre_header
    _
  $region3: #{conv_down_block.1} parent=0 // loop_header
    %s8 = sphi 0, %s12
    %p9 = scmp.ge.s32.totalorder %s8, 4
    %s15 = sphi 0, %s34
    %s16 = sphi 0, %s30
    %s17 = sphi 0, %s26
    %s18 = sphi 0, %s15
    %s19 = sphi 0, %s16
    %s20 = sphi 0, %s17
    %s21 = sphi 0, %s18
    %s22 = sphi 0, %s19
    %s23 = sphi 0, %s20
    %s39 = sphi 0, %s41
    %s42 = sphi 0, %s39
    %s43 = sphi 0, %s42
    %s59 = sphi 0, %s43
    %s67 = sphi 0, %s69
    %s70 = sphi 0, %s67
    %s71 = sphi 0, %s70
    %s87 = sphi 0, %s71
    %s95 = sphi 0, %s97
    %s98 = sphi 0, %s95
    %s99 = sphi 0, %s98
    %s115 = sphi 0, %s99
  $region4: #{conv_down_block.1} parent=0 // loop_header_branch
    %11 = sbr.rel (%p9) target = $region8
  $region5: #{conv_down_block.1} parent=0 // loop_body
    %s13 = ssub.s32 %s8, 1
    %s14 = ssub.s32 %s8, 2
    %s24 = sadd.s32 1, %s17
    %p25 = scmp.ge.s32.totalorder %s24, 1
    %s26 = scalar_select %p25, 0, %s24
    %s27 = sadd.s32 1, %s16
    %s28 = scalar_select %p25, %s27, %s16
    %p29 = scmp.ge.s32.totalorder %s28, 1
    %s30 = scalar_select %p29, 0, %s28
    %s31 = sadd.s32 1, %s15
    %s32 = scalar_select %p29, %s31, %s15
    %p33 = scmp.ge.s32.totalorder %s32, 2
    %s34 = scalar_select %p33, 0, %s32
    %s35 = ssub.s32 %s15, %s34
    %s36 = ssub.s32 %s17, %s26
    %s37 = sor.u32 %s35, %s36
    %p38 = scmp.eq.s32.totalorder %s37, 0
    %s40 = sadd.s32 %s39, 1
    %s41 = scalar_select %p38, %s39, %s40
    %p44 = pneg %p38
    %p45 = scmp.eq.s32.totalorder %s8, 1
    %p46 = por %p44, %p45
    %p47 = scmp.ne.s32.totalorder %s39, %s42
    %p48 = scmp.eq.s32.totalorder %s8, 0
    %p49 = por %p47, %p48
    %p50 = scmp.ne.s32.totalorder %s39, %s42
    %p51 = scmp.eq.s32.totalorder %s13, 1
    %p52 = por %p50, %p51
    %p53 = scmp.ne.s32.totalorder %s42, %s43
    %p54 = scmp.eq.s32.totalorder %s13, 0
    %p55 = por %p53, %p54
    %p56 = scmp.ne.s32.totalorder %s42, %s43
    %p57 = scmp.eq.s32.totalorder %s14, 1
    %p58 = por %p56, %p57
    %p60 = scmp.ne.s32.totalorder %s43, %s59
    %p61 = scmp.eq.s32.totalorder %s14, 0
    %p62 = por %p60, %p61
    %s63 = ssub.s32 %s16, %s30
    %s64 = ssub.s32 %s17, %s26
    %s65 = sor.u32 %s63, %s64
    %p66 = scmp.eq.s32.totalorder %s65, 0
    %s68 = sadd.s32 %s67, 1
    %s69 = scalar_select %p66, %s67, %s68
    %p72 = pneg %p66
    %p73 = scmp.eq.s32.totalorder %s8, 1
    %p74 = por %p72, %p73
    %p75 = scmp.ne.s32.totalorder %s67, %s70
    %p76 = scmp.eq.s32.totalorder %s8, 0
    %p77 = por %p75, %p76
    %p78 = scmp.ne.s32.totalorder %s67, %s70
    %p79 = scmp.eq.s32.totalorder %s13, 1
    %p80 = por %p78, %p79
    %p81 = scmp.ne.s32.totalorder %s70, %s71
    %p82 = scmp.eq.s32.totalorder %s13, 0
    %p83 = por %p81, %p82
    %p84 = scmp.ne.s32.totalorder %s70, %s71
    %p85 = scmp.eq.s32.totalorder %s14, 1
    %p86 = por %p84, %p85
    %p88 = scmp.ne.s32.totalorder %s71, %s87
    %p89 = scmp.eq.s32.totalorder %s14, 0
    %p90 = por %p88, %p89
    %s91 = ssub.s32 %s15, %s34
    %s92 = ssub.s32 %s16, %s30
    %s93 = sor.u32 %s91, %s92
    %p94 = scmp.eq.s32.totalorder %s93, 0
    %s96 = sadd.s32 %s95, 1
    %s97 = scalar_select %p94, %s95, %s96
    %p100 = pneg %p94
    %p101 = scmp.eq.s32.totalorder %s8, 1
    %p102 = por %p100, %p101
    %p103 = scmp.ne.s32.totalorder %s95, %s98
    %p104 = scmp.eq.s32.totalorder %s8, 0
    %p105 = por %p103, %p104
    %p106 = scmp.ne.s32.totalorder %s95, %s98
    %p107 = scmp.eq.s32.totalorder %s13, 1
    %p108 = por %p106, %p107
    %p109 = scmp.ne.s32.totalorder %s98, %s99
    %p110 = scmp.eq.s32.totalorder %s13, 0
    %p111 = por %p109, %p110
    %p112 = scmp.ne.s32.totalorder %s98, %s99
    %p113 = scmp.eq.s32.totalorder %s14, 1
    %p114 = por %p112, %p113
    %p116 = scmp.ne.s32.totalorder %s99, %s115
    %p117 = scmp.eq.s32.totalorder %s14, 0
    %p118 = por %p116, %p117
    %p119 = scmp.le.s32.totalorder 1, %s8
    %p120 = scmp.lt.s32.totalorder %s8, 3
    %p121 = pnand %p119, %p120
    %p122 = pneg %p121
    // Predicated region
    $region9: #{conv_down_block.1} parent=5 // pred_check
      _
    $region10: #{conv_down_block.1} parent=5 // pred_check_branch
      %124 = sbr.rel (%p121) target = $region12
    $region11: #{conv_down_block.1} parent=5 // pred_region
      %s125 = ssub.s32 %s8, 1
      // Predicated region
      $region13: #{conv_down_block.1} parent=11 // pred_check
        %p126 = pneg %p83
      $region14: #{conv_down_block.1} parent=11 // pred_check_branch
        %128 = sbr.rel (%p126) target = $region16
      $region15: #{conv_down_block.1} parent=11 // pred_region
        %p129 = scmp.lt.s32.totalorder %s19, 0
        %s130 = scalar_select %p129, %s19, 0
        %p131 = scmp.lt.s32.totalorder %s20, 0
        %s132 = scalar_select %p131, %s20, 0
        %s133 = sadd.s32 %s132, %s130
        %s134 = smul.addr %s133, 4
        %s135 = scalar_lea.vmem %s1, %s134
      $region16: #{conv_down_block.1} parent=11 // pred_fallthru
        _
    $region12: #{conv_down_block.1} parent=5 // pred_fallthru
      _
    %p136 = scmp.lt.s32.totalorder %s8, 2
    // Predicated region
    $region17: #{conv_down_block.1} parent=5 // pred_check
      %p137 = pneg %p136
    $region18: #{conv_down_block.1} parent=5 // pred_check_branch
      %139 = sbr.rel (%p137) target = $region20
    $region19: #{conv_down_block.1} parent=5 // pred_region
      // Predicated region
      $region21: #{conv_down_block.1} parent=19 // pred_check
        %p140 = pneg %p49
      $region22: #{conv_down_block.1} parent=19 // pred_check_branch
        %142 = sbr.rel (%p140) target = $region24
      $region23: #{conv_down_block.1} parent=19 // pred_region
        %s143 = smul.u32 8, %s17
        %p144 = scmp.lt.s32.totalorder %s15, 1
        %s145 = scalar_select %p144, %s15, 1
        %p146 = scmp.lt.s32.totalorder %s143, 7
        %s147 = scalar_select %p146, %s143, 7
        %s148 = smul.addr %s145, 8
        %s149 = sadd.s32 %s147, %s148
        %s150 = smul.addr %s149, 4
        %s151 = scalar_lea.vmem %s0, %s150
        %s152 = smul.u32 8, %s17
      $region24: #{conv_down_block.1} parent=19 // pred_fallthru
        _
    $region20: #{conv_down_block.1} parent=5 // pred_fallthru
      _
    %p153 = scmp.le.s32.totalorder 1, %s8
    %p154 = scmp.lt.s32.totalorder %s8, 3
    %p155 = pnand %p153, %p154
    %p156 = pneg %p155
    // Predicated region
    $region25: #{conv_down_block.1} parent=5 // pred_check
      _
    $region26: #{conv_down_block.1} parent=5 // pred_check_branch
      %158 = sbr.rel (%p155) target = $region28
    $region27: #{conv_down_block.1} parent=5 // pred_region
      %s159 = ssub.s32 %s8, 1
      %s160 = smul.u32 8, %s20
      %p161 = scmp.lt.s32.totalorder %s18, 1
      %s162 = scalar_select %p161, %s18, 1
      %p163 = scmp.lt.s32.totalorder %s160, 7
      %s164 = scalar_select %p163, %s160, 7
      %s165 = smul.addr %s162, 8
      %s166 = sadd.s32 %s164, %s165
      %s167 = smul.addr %s166, 4
      %s168 = scalar_lea.vmem %s0, %s167
      %p169 = pneg %p55
      %p170 = pneg %p52
      %p171 = scmp.lt.s32.totalorder %s19, 0
      %s172 = scalar_select %p171, %s19, 0
      %p173 = scmp.lt.s32.totalorder %s20, 0
      %s174 = scalar_select %p173, %s20, 0
      %s175 = sadd.s32 %s174, %s172
      %s176 = smul.addr %s175, 4
      %s177 = scalar_lea.vmem %s1, %s176
      %p178 = pneg %p83
      %p179 = pneg %p80
      %p180 = pneg %p111
      %p181 = pneg %p108
      %p182 = scmp.lt.s32.totalorder %s18, 1
      %s183 = scalar_select %p182, %s18, 1
      %p184 = scmp.lt.s32.totalorder %s19, 0
      %s185 = scalar_select %p184, %s19, 0
      %s186 = sadd.s32 %s185, %s183
      %s187 = smul.addr %s186, 4
      %s188 = scalar_lea.vmem %s2, %s187
      %s189 = smul.u32 8, %s20
      %p190 = scmp.lt.s32.totalorder %s18, 1
      %s191 = scalar_select %p190, %s18, 1
      %p192 = scmp.lt.s32.totalorder %s189, 7
      %s193 = scalar_select %p192, %s189, 7
      %s194 = smul.addr %s191, 8
      %s195 = sadd.s32 %s193, %s194
      %s196 = smul.addr %s195, 4
      %s197 = scalar_lea.vmem %s0, %s196
      %s198 = smul.u32 8, %s20
      %p199 = scmp.lt.s32.totalorder %s19, 0
      %s200 = scalar_select %p199, %s19, 0
      %p201 = scmp.lt.s32.totalorder %s20, 0
      %s202 = scalar_select %p201, %s20, 0
      %s203 = sadd.s32 %s202, %s200
      %s204 = smul.addr %s203, 4
      %s205 = scalar_lea.vmem %s1, %s204
      %p206 = scmp.lt.s32.totalorder %s18, 1
      %s207 = scalar_select %p206, %s18, 1
      %p208 = scmp.lt.s32.totalorder %s19, 0
      %s209 = scalar_select %p208, %s19, 0
      %s210 = sadd.s32 %s209, %s207
      %s211 = smul.addr %s210, 4
      %s212 = scalar_lea.vmem %s2, %s211
      %v214 = vld [vmem:[%s205] sm:$0xf]
      %v215 = vld [vmem:[%s197] sm:$0xf]
      %v216 = vld [vmem:[%s197 + $0x4] sm:$0xf]
      %v217 = vld [vmem:[%s197 + $0x8] sm:$0xf]
      %v218 = vld [vmem:[%s197 + $0xc] sm:$0xf]
      %v219 = vld [vmem:[%s197 + $0x10] sm:$0xf]
      %v220 = vld [vmem:[%s197 + $0x14] sm:$0xf]
      %v221 = vld [vmem:[%s197 + $0x18] sm:$0xf]
      %v222 = vld [vmem:[%s197 + $0x1c] sm:$0xf]
      %v231 = vunpack.c.l.b16 %v215
      %v232 = vunpack.c.l.b16 %v216
      %v233 = vunpack.c.l.b16 %v217
      %v234 = vunpack.c.l.b16 %v218
      %v235 = vunpack.c.l.b16 %v219
      %v236 = vunpack.c.l.b16 %v220
      %v237 = vunpack.c.l.b16 %v221
      %v238 = vunpack.c.l.b16 %v222
      %v239 = vpack.c.b16 %v232, %v231
      %v240 = vpack.c.b16 %v234, %v233
      %v241 = vpack.c.b16 %v236, %v235
      %v242 = vpack.c.b16 %v238, %v237
      %vm247 = vcmask 523264
      %v249 = vsel %vm247, %v214, 0
      %251 = vmatprep.subr.bf16.mxu0 0
      %252 = vmatpush1.bf16.msra.mxu0 0
      %253 = vmatprep.subr.bf16.mxu0 0
      %254 = vmatpush1.bf16.msra.mxu0 0
      %255 = vmatprep.subr.bf16.mxu0 0
      %256 = vmatpush1.bf16.msra.mxu0 0
      %257 = vmatprep.subr.bf16.mxu0 0
      %258 = vmatpush1.bf16.msra.mxu0 0
      %259 = vmatprep.subr.bf16.mxu0 0
      %260 = vmatpush1.bf16.msra.mxu0 %v242
      %261 = vmatprep.subr.bf16.mxu0 0
      %262 = vmatpush1.bf16.msra.mxu0 %v241
      %263 = vmatprep.subr.bf16.mxu0 0
      %264 = vmatpush1.bf16.msra.mxu0 %v240
      %265 = vmatprep.subr.bf16.mxu0 0
      %266 = vmatpush1.bf16.msra.mxu0 %v239
      %267 = vmatprep.subr.bf16.mxu0 0
      %268 = vmatpush2.bf16.msra.mxu0 0
      %269 = vmatprep.subr.bf16.mxu0 0
      %270 = vmatpush2.bf16.msra.mxu0 0
      %271 = vmatprep.subr.bf16.mxu0 0
      %272 = vmatpush2.bf16.msra.mxu0 0
      %273 = vmatprep.subr.bf16.mxu0 0
      %274 = vmatpush2.bf16.msra.mxu0 0
      %275 = vmatprep.subr.bf16.mxu0 0
      %276 = vmatpush2.bf16.msra.mxu0 0
      %277 = vmatprep.subr.bf16.mxu0 0
      %278 = vmatpush2.bf16.msra.mxu0 0
      %279 = vmatprep.subr.bf16.mxu0 0
      %280 = vmatpush2.bf16.msra.mxu0 0
      %281 = vmatprep.subr.bf16.mxu0 0
      %282 = vmatpush2.bf16.msra.mxu0 0
      %283 = vmatprep.mubr.bf16.mxu0 0
      %284 = vmatmul.mubr.bf16.gmra.mxu0 %v249
      %v285 = vpop.f32.mrf.mxu0
      %v286 = vadd.f32 0.0, %v285
      %v287 = vpop.f32.mrf.mxu0
      %v288 = vpop.f32.mrf.mxu0
      %v289 = vpop.f32.mrf.mxu0
      %290 = vdwg.mxu0
      %p291 = scmp.eq.s32.totalorder %s20, 0
      // Predicated region
      $region29: #{conv_down_block.1} parent=27 // pred_check
        %p292 = pneg %p291
      $region30: #{conv_down_block.1} parent=27 // pred_check_branch
        %294 = sbr.rel (%p292) target = $region32
      $region31: #{conv_down_block.1} parent=27 // pred_region
        %295 = vst.msk [vmem:[#allocation2] sm:$0xff] %vm247, %v286
      $region32: #{conv_down_block.1} parent=27 // pred_fallthru
        _
      %p296 = scmp.ne.s32.totalorder %s20, 0
      // Predicated region
      $region33: #{conv_down_block.1} parent=27 // pred_check
        %p297 = pneg %p296
      $region34: #{conv_down_block.1} parent=27 // pred_check_branch
        %299 = sbr.rel (%p297) target = $region36
      $region35: #{conv_down_block.1} parent=27 // pred_region
        %v300 = vld [vmem:[#allocation2] sm:$0xff]
        %v301 = vadd.f32 %v300, %v286
        %302 = vst.msk [vmem:[#allocation2] sm:$0xff] %vm247, %v301
      $region36: #{conv_down_block.1} parent=27 // pred_fallthru
        _
      // Predicated region
      $region37: #{conv_down_block.1} parent=27 // pred_check
        %p303 = pneg %p291
      $region38: #{conv_down_block.1} parent=27 // pred_check_branch
        %305 = sbr.rel (%p303) target = $region40
      $region39: #{conv_down_block.1} parent=27 // pred_region
        %v306 = vld [vmem:[#allocation2] sm:$0xff]
        %v307 = vsel %vm247, %v306, 0.0
        %308 = vadd.xlane.f32.xlu0 %v307
        %v309 = vpop.xlane.xlu0 %308
        %v310 = vmul.f32 %v309, 0.015625
        %v311 = vsub.f32 %v306, %v310
        %v312 = vmul.f32 %v311, %v311
        %v313 = vsel %vm247, %v312, 0.0
        %314 = vadd.xlane.f32.xlu0 %v313
        %v315 = vpop.xlane.xlu0 %314
        %v316 = vmul.f32 %v315, 0.015625
        %v317 = vadd.f32 %v316, 1e-05
        %v318 = vrsqrt.pop %v317
        %v319 = vmul.f32 %v311, %v318
        %vm320 = vcmp.ge.f32.partialorder %v319, 0.0
        %v321 = vmul.f32 %v319, 0.2
        %v322 = vsel %vm320, %v319, %v321
        %v323 = vpack.c.bf16 %v322, %v322
        %vm324 = vcmask 519168
        %325 = vst.msk [vmem:[%s212] sm:$0xf] %vm324, %v323
      $region40: #{conv_down_block.1} parent=27 // pred_fallthru
        _
      %p326 = scmp.lt.s32.totalorder %s18, 1
      %s327 = scalar_select %p326, %s18, 1
      %p328 = scmp.lt.s32.totalorder %s19, 0
      %s329 = scalar_select %p328, %s19, 0
      %s330 = sadd.s32 %s329, %s327
      %s331 = smul.addr %s330, 4
      %s332 = scalar_lea.vmem %s2, %s331
      // Predicated region
      $region41: #{conv_down_block.1} parent=27 // pred_check
        %p333 = pneg %p108
      $region42: #{conv_down_block.1} parent=27 // pred_check_branch
        %335 = sbr.rel (%p333) target = $region44
      $region43: #{conv_down_block.1} parent=27 // pred_region
        _
      $region44: #{conv_down_block.1} parent=27 // pred_fallthru
        _
    $region28: #{conv_down_block.1} parent=5 // pred_fallthru
      _
    %p336 = scmp.le.s32.totalorder 2, %s8
    // Predicated region
    $region45: #{conv_down_block.1} parent=5 // pred_check
      %p337 = pneg %p336
    $region46: #{conv_down_block.1} parent=5 // pred_check_branch
      %339 = sbr.rel (%p337) target = $region48
    $region47: #{conv_down_block.1} parent=5 // pred_region
      %s340 = ssub.s32 %s8, 2
      // Predicated region
      $region49: #{conv_down_block.1} parent=47 // pred_check
        %p341 = pneg %p114
      $region50: #{conv_down_block.1} parent=47 // pred_check_branch
        %343 = sbr.rel (%p341) target = $region52
      $region51: #{conv_down_block.1} parent=47 // pred_region
        %p344 = scmp.lt.s32.totalorder %s21, 1
        %s345 = scalar_select %p344, %s21, 1
        %p346 = scmp.lt.s32.totalorder %s22, 0
        %s347 = scalar_select %p346, %s22, 0
        %s348 = sadd.s32 %s347, %s345
        %s349 = smul.addr %s348, 4
        %s350 = scalar_lea.vmem %s2, %s349
      $region52: #{conv_down_block.1} parent=47 // pred_fallthru
        _
    $region48: #{conv_down_block.1} parent=5 // pred_fallthru
      _
  $region6: #{conv_down_block.1} parent=0 // loop_footer
    %s12 = sadd.s32 1, %s8
  $region7: #{conv_down_block.1} parent=0 // loop_footer_branch
    %7 = sbr.rel target = $region3
  $region8: #{conv_down_block.1} parent=0 // loop_exit
    _

</llo_original>
